<compile_context>
chip_gen: v7x
topology: tpu7x:2x2x1
jax: 0.10.0
libtpu: 0.0.40
codegen_flags: <defaults>
</compile_context>

<pallas_src>
import functools

import jax
import jax.numpy as jnp
from jax import lax
from jax.experimental import pallas as pl
from jax.experimental.pallas import tpu as pltpu

_MIB = 1024 * 1024


def _round_up(x, m):
    return ((x + m - 1) // m) * m


def _vmem_capacity_bytes():
    """Physical VMEM per core (generation-aware); conservative fallback."""
    try:
        return int(pltpu.get_tpu_info().vmem_capacity_bytes)
    except Exception:
        return 64 * _MIB  # v7x per-TC size = most conservative generation


def _resident_budget_bytes():
    # ~104 MiB on v5e/v6e (128 MiB VMEM), ~40 MiB on v7x (64 MiB per TC).
    return max(_vmem_capacity_bytes() - 24 * _MIB, 32 * _MIB)


def _vmem_limit_cap():
    return max(_vmem_capacity_bytes() - 16 * _MIB, 32 * _MIB)


def _choose_stream_tile(n, max_tile, itemsize):
    """Pick the streamed A-tile size: balance padding waste vs per-step overhead."""
    max_tile = max(128, min(max_tile, _round_up(n, 128)))
    best = None
    for cand in (2048, 1536, 1280, 1024, 896, 768, 640, 512, 384, 256, 128):
        if cand > max_tile:
            continue
        npad = _round_up(n, cand)
        nblk = npad // cand
        # Rough per-iteration cost: A bytes at ~1 TB/s + ~0.35us per grid step.
        cost = npad * npad * itemsize * 1e-12 + nblk * nblk * 0.35e-6
        if best is None or cost < best[0]:
            best = (cost, cand, npad)
    return best[1], best[2]


# ---------------------------------------------------------------------------
# Fused, fully VMEM-resident path (A_hat read from HBM exactly once).
# ---------------------------------------------------------------------------
def _ppr_resident_kernel(a_ref, lp_ref, o_ref, *, alpha, niter):
    """a_ref: [N, N] A_hat^T ; lp_ref: [C, N] local_preds^T ; o_ref: [C, N] preds^T."""
    alpha_lp = alpha * lp_ref[...]          # hoisted out of the loop
    o_ref[...] = lp_ref[...]                # preds = local_preds

    def body(_, carry):
        o_ref[...] = (
            jnp.dot(o_ref[...].astype(a_ref.dtype), a_ref[...],
                    preferred_element_type=jnp.float32)
            + alpha_lp
        )
        return carry

    lax.fori_loop(0, niter, body, 0)


def _ppr_resident(a_hat_t, lp_t, alpha, niter):
    c, n = lp_t.shape
    a_bytes = a_hat_t.dtype.itemsize * n * n
    hbm_bytes = a_bytes + 4 * 2 * c * n
    vmem_limit = int(min(hbm_bytes + 4 * 2 * c * n + 8 * _MIB, _vmem_limit_cap()))
    vmem_spec = pl.BlockSpec(memory_space=pltpu.MemorySpace.VMEM)
    kernel = functools.partial(_ppr_resident_kernel, alpha=alpha, niter=niter)
    return pl.pallas_call(
        kernel,
        out_shape=jax.ShapeDtypeStruct((c, n), jnp.float32),
        in_specs=[vmem_spec, vmem_spec],
        out_specs=vmem_spec,
        cost_estimate=pl.CostEstimate(
            flops=2 * n * n * c * niter,
            transcendentals=0,
            bytes_accessed=hbm_bytes,
        ),
        compiler_params=pltpu.CompilerParams(vmem_limit_bytes=vmem_limit),
    )(a_hat_t, lp_t)


# ---------------------------------------------------------------------------
# Fused streamed fallback: A_hat^T tiles re-streamed once per iteration,
# preds^T state VMEM-resident in ping-pong slots across the whole grid.
# ---------------------------------------------------------------------------
def _ppr_streamed_kernel(a_ref, lp_hbm, o_ref, p_ref, alp_ref, *, alpha, nblk):
    """One (iteration, out-column-block, reduction-block) grid step.

    a_ref  : [T, T]            tile (k, j) of A_hat^T (auto-pipelined)
    lp_hbm : [nblk, C, T] HBM  local_preds^T, column-blocked (pl.ANY, no VMEM buffer)
    o_ref  : [C, T]            output column block j (resident across k; the accumulator)
    p_ref  : [2*nblk, C, T]    ping-pong preds^T: read slot it%2, write slot (it+1)%2
    alp_ref: [nblk, C, T]      alpha * local_preds^T (resident)
    """
    it = pl.program_id(0)
    j = pl.program_id(1)
    k = pl.program_id(2)
    nk = pl.num_programs(2)
    rd = it % 2
    wr = (it + 1) % 2

    # One-time setup: pull local_preds^T from HBM into the ping-pong slot 0
    # (seed preds_0 = local_preds) and pre-scale alpha * local_preds^T.
    @pl.when((it == 0) & (j == 0) & (k == 0))
    def _():
        pltpu.sync_copy(lp_hbm, p_ref.at[0:nblk])
        alp_ref[...] = alpha * p_ref[0:nblk]

    # New output column block: fully overwrite with alpha * local_preds block.
    # (Required on every revisit across the `it` axis.)
    @pl.when(k == 0)
    def _():
        o_ref[...] = alp_ref[j]

    # Accumulate preds^T[:, k-block] @ A_hat^T[k-block, j-block] directly into
    # the resident output block.
    o_ref[...] += jnp.dot(
        p_ref[rd * nblk + k].astype(a_ref.dtype), a_ref[...],
        preferred_element_type=jnp.float32)

    # Column block finished -> stash it in the other ping-pong slot (no full
    # end-of-iteration VMEM->VMEM copy).
    @pl.when(k == nk - 1)
    def _():
        p_ref[wr * nblk + j] = o_ref[...]


def _ppr_streamed(a_hat_t, lp_t, alpha, niter, max_tile=1024):
    c, n = lp_t.shape
    a_itemsize = a_hat_t.dtype.itemsize
    t, n_pad = _choose_stream_tile(n, max_tile, a_itemsize)
    nblk = n_pad // t
    if n_pad != n:
        # Zero padding keeps the iteration exact: padded rows/cols of A_hat^T
        # are zero, so padded preds columns stay zero and never leak back in.
        pad = n_pad - n
        a_hat_t = jnp.pad(a_hat_t, ((0, pad), (0, pad)))
        lp_t = jnp.pad(lp_t, ((0, 0), (0, pad)))

    # Column-blocked view [nblk, C, T]: the kernel only ever needs dynamic
    # indexing on a leading axis (never a dynamic lane-dim slice).
    lp_blocked = jnp.moveaxis(lp_t.reshape(c, nblk, t), 1, 0)

    # VMEM: double-buffered A tile + output block (+ pipeline copy) +
    # ping-pong preds (2*C*N_pad) + alpha*lp (C*N_pad) + margin.
    vmem_needed = (2 * a_itemsize * t * t + 2 * 4 * c * t
                   + 3 * 4 * c * n_pad + 16 * _MIB)
    vmem_limit = int(min(vmem_needed, _vmem_limit_cap()))
    # TODO(synk): for graphs where the resident preds state (3*C*N_pad f32)
    # itself no longer fits VMEM, the preds state would also need tiling.

    kernel = functools.partial(_ppr_streamed_kernel, alpha=alpha, nblk=nblk)
    out_blocked = pl.pallas_call(
        kernel,
        out_shape=jax.ShapeDtypeStruct((nblk, c, t), jnp.float32),
        grid_spec=pltpu.PrefetchScalarGridSpec(
            num_scalar_prefetch=0,
            grid=(niter, nblk, nblk),
            in_specs=[
                pl.BlockSpec((t, t), lambda it, j, k: (k, j)),   # A_hat^T tile
                pl.BlockSpec(memory_space=pl.ANY),               # local_preds^T (HBM)
            ],
            out_specs=pl.BlockSpec((None, c, t), lambda it, j, k: (j, 0, 0)),
            scratch_shapes=[
                pltpu.VMEM((2 * nblk, c, t), jnp.float32),  # ping-pong preds^T
                pltpu.VMEM((nblk, c, t), jnp.float32),      # alpha * local_preds^T
            ],
        ),
        cost_estimate=pl.CostEstimate(
            flops=2 * n_pad * n_pad * c * niter,
            transcendentals=0,
            bytes_accessed=a_itemsize * niter * n_pad * n_pad + 4 * 2 * c * n_pad,
        ),
        compiler_params=pltpu.CompilerParams(
            # Iterations are serial and j/k share resident VMEM state, so all
            # axes must be "arbitrary" (no megacore split of this grid).
            dimension_semantics=("arbitrary", "arbitrary", "arbitrary"),
            vmem_limit_bytes=vmem_limit,
        ),
    )(a_hat_t, lp_blocked)

    out_t = jnp.moveaxis(out_blocked, 0, 1).reshape(c, n_pad)
    return out_t[:, :n]


# ---------------------------------------------------------------------------
# Public wrapper (== PPRPowerIteration.forward for drop_prob in {None, 0}).
# ---------------------------------------------------------------------------
def ppr_power_iteration(a_hat, local_preds, idx, alpha, niter, *,
                        symmetric=True, a_dtype=jnp.float32,
                        force_streamed=False, stream_tile=None):
    """Pallas-backed equivalent of PPRPowerIteration.forward (no dropout)."""
    n = a_hat.shape[0]
    c = local_preds.shape[1]
    a_dtype = jnp.dtype(a_dtype)

    lp_t = jnp.transpose(local_preds.astype(jnp.float32))     # [C, N], lane-dense
    a_hat = a_hat.astype(a_dtype)
    # calc_A_hat output is symmetric -> A_hat^T == A_hat, skip the materialized
    # N^2 HBM transpose.  Only transpose when explicitly told it's asymmetric.
    a_hat_t = a_hat if symmetric else jnp.transpose(a_hat)

    if stream_tile is None:
        stream_tile = 1024
        if a_dtype.itemsize <= 2 and _vmem_capacity_bytes() >= 96 * _MIB:
            stream_tile = 1536   # bf16 A on 128 MiB parts: bigger tiles fit

    if niter <= 0:
        out_t = lp_t
    else:
        resident_bytes = a_dtype.itemsize * n * n + 4 * 3 * c * n
        if resident_bytes <= _resident_budget_bytes() and not force_streamed:
            out_t = _ppr_resident(a_hat_t, lp_t, float(alpha), int(niter))
        else:
            out_t = _ppr_streamed(a_hat_t, lp_t, float(alpha), int(niter),
                                  max_tile=stream_tile)

    # Final index-select as a ROW gather on the tiny [N, C] array
    # (lane-dimension gathers lower poorly on TPU).
    return jnp.take(jnp.transpose(out_t), idx, axis=0)         # [K, C]


def calc_a_hat_dense(adj, alpha):
    """Dense JAX version of calc_A_hat, pre-scaled by (1 - alpha)."""
    n = adj.shape[0]
    a = adj + jnp.eye(n, dtype=adj.dtype)
    d = jnp.sum(a, axis=1)
    d_invsqrt = 1.0 / jnp.sqrt(d)
    m = d_invsqrt[:, None] * a * d_invsqrt[None, :]
    return (1.0 - alpha) * m


def reference_forward(a_hat, local_preds, idx, alpha, niter):
    preds = local_preds
    for _ in range(niter):
        preds = a_hat @ preds + alpha * local_preds
    return preds[idx]


if __name__ == "__main__":
    key = jax.random.PRNGKey(0)
    k_adj, k_preds, k_idx = jax.random.split(key, 3)

    N = 256       # graph nodes
    C = 32        # classes (feature dim of local_preds)
    K = 64        # query indices
    ALPHA = 0.1
    NITER = 10
    # TODO(synk): MixedDropout on A_hat (drop_prob != 0) not implemented; this
    # matches the drop_prob in {None, 0} path of the module.

    # Deterministic synthetic symmetric adjacency (no self-loops).
    rand = jax.random.uniform(k_adj, (N, N))
    upper = (rand > 0.9).astype(jnp.float32)
    adj = jnp.triu(upper, k=1)
    adj = adj + adj.T

    a_hat = calc_a_hat_dense(adj, ALPHA).astype(jnp.float32)
    local_preds = jax.random.normal(k_preds, (N, C), dtype=jnp.float32)
    idx = jax.random.randint(k_idx, (K,), 0, N, dtype=jnp.int32)

    ref = reference_forward(a_hat, local_preds, idx, ALPHA, NITER)

    # 1) Fused, fully VMEM-resident f32 path (auto-selected at this size).
    out = jax.jit(
        lambda a, lp, ix: ppr_power_iteration(a, lp, ix, ALPHA, NITER)
    )(a_hat, local_preds, idx)
    out = jax.block_until_ready(out)
    assert out.shape == (K, C)
    assert jnp.allclose(out, ref, atol=1e-4, rtol=1e-4), "resident path mismatch"

    # 2) Streamed fallback (small tile so nblk > 1: exercises ping-pong preds,
    #    revisited-output init, and the explicit-transpose code path).
    out_s = jax.jit(
        lambda a, lp, ix: ppr_power_iteration(
            a, lp, ix, ALPHA, NITER, force_streamed=True, stream_tile=128,
            symmetric=False)
    )(a_hat, local_preds, idx)
    out_s = jax.block_until_ready(out_s)
    assert out_s.shape == (K, C)
    assert jnp.allclose(out_s, ref, atol=1e-4, rtol=1e-4), "streamed path mismatch"

    # 3) Streamed path with padding (N not a multiple of the tile).
    N2 = 200
    a_hat2 = calc_a_hat_dense(adj[:N2, :N2], ALPHA).astype(jnp.float32)
    lp2 = local_preds[:N2]
    idx2 = jnp.clip(idx, 0, N2 - 1)
    ref2 = reference_forward(a_hat2, lp2, idx2, ALPHA, NITER)
    out_p = jax.jit(
        lambda a, lp, ix: ppr_power_iteration(
            a, lp, ix, ALPHA, NITER, force_streamed=True, stream_tile=128)
    )(a_hat2, lp2, idx2)
    out_p = jax.block_until_ready(out_p)
    assert jnp.allclose(out_p, ref2, atol=1e-4, rtol=1e-4), "padded streamed mismatch"

    # 4) Optional bf16 A_hat (halves A HBM/VMEM traffic); looser tolerance.
    out_b = jax.jit(
        lambda a, lp, ix: ppr_power_iteration(a, lp, ix, ALPHA, NITER,
                                              a_dtype=jnp.bfloat16)
    )(a_hat, local_preds, idx)
    out_b = jax.block_until_ready(out_b)
    assert out_b.shape == (K, C)
    assert jnp.allclose(out_b, ref, atol=5e-2, rtol=5e-2), "bf16 A_hat path mismatch"

    print("KERNEL_OK")
</pallas_src>

<mosaic_0001>
module attributes {stable_mosaic.version = 11 : i64} {
  func.func @_ppr_resident_kernel(%arg0: memref<256x256xf32, #tpu.memory_space<vmem>>, %arg1: memref<32x256xf32, #tpu.memory_space<vmem>>, %arg2: memref<32x256xf32, #tpu.memory_space<vmem>>) attributes {dimension_semantics = [], scalar_prefetch = 0 : i64, scratch_operands = 0 : i64, tpu.core_type = #tpu.core_type<tc>} {
    %c0 = arith.constant 0 : index
    %c0_0 = arith.constant 0 : index
    %0 = vector.load %arg1[%c0, %c0_0] : memref<32x256xf32, #tpu.memory_space<vmem>>, vector<32x256xf32>
    %cst = arith.constant 1.000000e-01 : f32
    %1 = vector.broadcast %cst : f32 to vector<32x256xf32>
    %2 = arith.mulf %1, %0 : vector<32x256xf32>
    %c0_1 = arith.constant 0 : index
    %c0_2 = arith.constant 0 : index
    %3 = vector.load %arg1[%c0_1, %c0_2] : memref<32x256xf32, #tpu.memory_space<vmem>>, vector<32x256xf32>
    %c0_3 = arith.constant 0 : index
    %c0_4 = arith.constant 0 : index
    %4 = vector.load %arg2[%c0_3, %c0_4] : memref<32x256xf32, #tpu.memory_space<vmem>>, vector<32x256xf32>
    tpu.vector_store %arg2[%c0_3, %c0_4], %3 {strides = array<i32>} : memref<32x256xf32, #tpu.memory_space<vmem>>, vector<32x256xf32>,
    %c0_i32 = arith.constant 0 : i32
    %c10_i32 = arith.constant 10 : i32
    %5 = arith.addi %c0_i32, %c10_i32 : i32
    %c1_i32 = arith.constant 1 : i32
    scf.for %arg3 = %c0_i32 to %5 step %c1_i32  : i32 {
      %c0_5 = arith.constant 0 : index
      %c0_6 = arith.constant 0 : index
      %6 = vector.load %arg2[%c0_5, %c0_6] : memref<32x256xf32, #tpu.memory_space<vmem>>, vector<32x256xf32>
      %c0_7 = arith.constant 0 : index
      %c0_8 = arith.constant 0 : index
      %7 = vector.load %arg0[%c0_7, %c0_8] : memref<256x256xf32, #tpu.memory_space<vmem>>, vector<256x256xf32>
      %cst_9 = arith.constant dense<0.000000e+00> : vector<32x256xf32>
      %8 = tpu.matmul %6, %7, %cst_9 {dimension_numbers = #tpu.dot_dimension_numbers<[1], [0], [0], [1], [0, 0, 1, 1], [], []>} : vector<32x256xf32>, vector<256x256xf32>, vector<32x256xf32> -> vector<32x256xf32>
      %9 = arith.addf %8, %2 : vector<32x256xf32>
      %c0_10 = arith.constant 0 : index
      %c0_11 = arith.constant 0 : index
      %10 = vector.load %arg2[%c0_10, %c0_11] : memref<32x256xf32, #tpu.memory_space<vmem>>, vector<32x256xf32>
      tpu.vector_store %arg2[%c0_10, %c0_11], %9 {strides = array<i32>} : memref<32x256xf32, #tpu.memory_space<vmem>>, vector<32x256xf32>,
    }
    return
  }
}

</mosaic_0001>

<llo_original>
// kernel: _lambda_.1
$region0: #{_lambda_.1}
  #allocation0 [shape = 'u32[]', space=smem, size = 0x4, offset = 0x4, fixed_abs, tag = 'smem constant byte address 0x4 - core index']
  #allocation1 [shape = 'u32[144,128]{1,0:T(1,128)}', space=vmem, size = 0x12000, scoped, tag = 'internal scratch']
  %s0 = inlined_call_operand.hbm [shape: f32[256,256], index: 0, kind: input, shape index: {}]
  %s1 = inlined_call_operand.hbm [shape: f32[32,256], index: 1, kind: input, shape index: {}]
  %s2 = inlined_call_operand.vmem [shape: f32[32,256], index: 2, kind: output, shape index: {}]
  %s3 = sld [smem:[#allocation0]]
  $region33: #{_lambda_.1} parent=0
    _
  %s5 = ssub.s32 1, %s3
  %s6 = scalar_select 0, %s5, %s3
  $region1: #{_lambda_.1} parent=0
    #allocation2 [shape = 'u8[262144]{0}', space=vmem, size = 0x40000, scoped, tag = 'input window, operand 0, single buffered']
    #allocation3 [shape = 's32[1]{0}', space=sflag, size = 0x4, scoped, tag = 'scoped memory for _lambda_.1']
    #allocation4 [shape = 'u8[32768]{0}', space=vmem, size = 0x8000, scoped, tag = 'input window, operand 1, single buffered']
    #allocation5 [shape = 's32[1]{0}', space=sflag, size = 0x4, scoped, tag = 'scoped memory for _lambda_.1']
    %7 = vsyncpa [#allocation3], 0
    %8 = vsyncpa [#allocation5], 0
    // Predicated region
    $region2: #{_lambda_.1} parent=1 // pred_check
      _
    $region3: #{_lambda_.1} parent=1 // pred_check_branch
      %10 = sbr.rel (0) target = $region5
    $region4: #{_lambda_.1} parent=1 // pred_region
      %s12 = ssub.s32 8192, 8192
      %13 = vsyncadd [#allocation3], %s12
      %s14 = sshll.u32 [#allocation2], 4
      %s15 = int_to_ptr.vmem [resolvable:$true] %s14
      %20 = dma.hbm_to_vmem [thread:$0]  %s0, 8192, %s15, [#allocation3], 256, 256, 16
    $region5: #{_lambda_.1} parent=1 // pred_fallthru
      _
    // Predicated region
    $region6: #{_lambda_.1} parent=1 // pred_check
      _
    $region7: #{_lambda_.1} parent=1 // pred_check_branch
      %22 = sbr.rel (0) target = $region9
    $region8: #{_lambda_.1} parent=1 // pred_region
      %s24 = ssub.s32 1024, 1024
      %25 = vsyncadd [#allocation5], %s24
      %s26 = sshll.u32 [#allocation4], 4
      %s27 = int_to_ptr.vmem [resolvable:$true] %s26
      %32 = dma.hbm_to_vmem [thread:$0]  %s1, 1024, %s27, [#allocation5], 256, 256, 16
    $region9: #{_lambda_.1} parent=1 // pred_fallthru
      _
    // Predicated region
    $region10: #{_lambda_.1} parent=1 // pred_check
      _
    $region11: #{_lambda_.1} parent=1 // pred_check_branch
      %34 = sbr.rel (0) target = $region13
    $region12: #{_lambda_.1} parent=1 // pred_region
      %35 = dma.done [#allocation3], 8192
    $region13: #{_lambda_.1} parent=1 // pred_fallthru
      _
    // Predicated region
    $region14: #{_lambda_.1} parent=1 // pred_check
      _
    $region15: #{_lambda_.1} parent=1 // pred_check_branch
      %37 = sbr.rel (0) target = $region17
    $region16: #{_lambda_.1} parent=1 // pred_region
      %38 = dma.done [#allocation5], 1024
    $region17: #{_lambda_.1} parent=1 // pred_fallthru
      _
    %v39 = vld [vmem:[#allocation4] sm:$0xff]
    %v40 = vld [vmem:[#allocation4 + $0x8] sm:$0xff]
    %v41 = vld [vmem:[#allocation4 + $0x10] sm:$0xff]
    %v42 = vld [vmem:[#allocation4 + $0x18] sm:$0xff]
    %v43 = vld [vmem:[#allocation4 + $0x20] sm:$0xff]
    %v44 = vld [vmem:[#allocation4 + $0x28] sm:$0xff]
    %v45 = vld [vmem:[#allocation4 + $0x30] sm:$0xff]
    %v46 = vld [vmem:[#allocation4 + $0x38] sm:$0xff]
    %v47 = vmul.f32 %v39, 0.1
    %v48 = vmul.f32 %v40, 0.1
    %v49 = vmul.f32 %v41, 0.1
    %v50 = vmul.f32 %v42, 0.1
    %v51 = vmul.f32 %v43, 0.1
    %v52 = vmul.f32 %v44, 0.1
    %v53 = vmul.f32 %v45, 0.1
    %v54 = vmul.f32 %v46, 0.1
    %55 = vst [vmem:[%s2] sm:$0xff] %v39
    %56 = vst [vmem:[%s2 + $0x8] sm:$0xff] %v40
    %57 = vst [vmem:[%s2 + $0x10] sm:$0xff] %v41
    %58 = vst [vmem:[%s2 + $0x18] sm:$0xff] %v42
    %59 = vst [vmem:[%s2 + $0x20] sm:$0xff] %v43
    %60 = vst [vmem:[%s2 + $0x28] sm:$0xff] %v44
    %61 = vst [vmem:[%s2 + $0x30] sm:$0xff] %v45
    %62 = vst [vmem:[%s2 + $0x38] sm:$0xff] %v46
    loop: start=0, step=1, limit=10
    $region18: #{_lambda_.1} parent=1 // loop_pre_header
      _
    $region19: #{_lambda_.1} parent=1 // loop_header
      %s64 = sphi 0, %s68
      %p65 = scmp.ge.s32.totalorder %s64, 10
    $region20: #{_lambda_.1} parent=1 // loop_header_branch
      %67 = sbr.rel (%p65) target = $region24
    $region21: #{_lambda_.1} parent=1 // loop_body
      %v69 = vld [vmem:[%s2] sm:$0xff]
      %v70 = vld [vmem:[%s2 + $0x8] sm:$0xff]
      %v71 = vld [vmem:[%s2 + $0x10] sm:$0xff]
      %v72 = vld [vmem:[%s2 + $0x18] sm:$0xff]
      %v73 = vld [vmem:[%s2 + $0x20] sm:$0xff]
      %v74 = vld [vmem:[%s2 + $0x28] sm:$0xff]
      %v75 = vld [vmem:[%s2 + $0x30] sm:$0xff]
      %v76 = vld [vmem:[%s2 + $0x38] sm:$0xff]
      %v77 = vld [vmem:[#allocation2] sm:$0xff]
      %v78 = vld [vmem:[#allocation2 + $0x8] sm:$0xff]
      %v79 = vld [vmem:[#allocation2 + $0x10] sm:$0xff]
      %v80 = vld [vmem:[#allocation2 + $0x18] sm:$0xff]
      %v81 = vld [vmem:[#allocation2 + $0x20] sm:$0xff]
      %v82 = vld [vmem:[#allocation2 + $0x28] sm:$0xff]
      %v83 = vld [vmem:[#allocation2 + $0x30] sm:$0xff]
      %v84 = vld [vmem:[#allocation2 + $0x38] sm:$0xff]
      %v85 = vld [vmem:[#allocation2 + $0x40] sm:$0xff]
      %v86 = vld [vmem:[#allocation2 + $0x48] sm:$0xff]
      %v87 = vld [vmem:[#allocation2 + $0x50] sm:$0xff]
      %v88 = vld [vmem:[#allocation2 + $0x58] sm:$0xff]
      %v89 = vld [vmem:[#allocation2 + $0x60] sm:$0xff]
      %v90 = vld [vmem:[#allocation2 + $0x68] sm:$0xff]
      %v91 = vld [vmem:[#allocation2 + $0x70] sm:$0xff]
      %v92 = vld [vmem:[#allocation2 + $0x78] sm:$0xff]
      %v93 = vld [vmem:[#allocation2 + $0x80] sm:$0xff]
      %v94 = vld [vmem:[#allocation2 + $0x88] sm:$0xff]
      %v95 = vld [vmem:[#allocation2 + $0x90] sm:$0xff]
      %v96 = vld [vmem:[#allocation2 + $0x98] sm:$0xff]
      %v97 = vld [vmem:[#allocation2 + $0xa0] sm:$0xff]
      %v98 = vld [vmem:[#allocation2 + $0xa8] sm:$0xff]
      %v99 = vld [vmem:[#allocation2 + $0xb0] sm:$0xff]
      %v100 = vld [vmem:[#allocation2 + $0xb8] sm:$0xff]
      %v101 = vld [vmem:[#allocation2 + $0xc0] sm:$0xff]
      %v102 = vld [vmem:[#allocation2 + $0xc8] sm:$0xff]
      %v103 = vld [vmem:[#allocation2 + $0xd0] sm:$0xff]
      %v104 = vld [vmem:[#allocation2 + $0xd8] sm:$0xff]
      %v105 = vld [vmem:[#allocation2 + $0xe0] sm:$0xff]
      %v106 = vld [vmem:[#allocation2 + $0xe8] sm:$0xff]
      %v107 = vld [vmem:[#allocation2 + $0xf0] sm:$0xff]
      %v108 = vld [vmem:[#allocation2 + $0xf8] sm:$0xff]
      %v109 = vld [vmem:[#allocation2 + $0x100] sm:$0xff]
      %v110 = vld [vmem:[#allocation2 + $0x108] sm:$0xff]
      %v111 = vld [vmem:[#allocation2 + $0x110] sm:$0xff]
      %v112 = vld [vmem:[#allocation2 + $0x118] sm:$0xff]
      %v113 = vld [vmem:[#allocation2 + $0x120] sm:$0xff]
      %v114 = vld [vmem:[#allocation2 + $0x128] sm:$0xff]
      %v115 = vld [vmem:[#allocation2 + $0x130] sm:$0xff]
      %v116 = vld [vmem:[#allocation2 + $0x138] sm:$0xff]
      %v117 = vld [vmem:[#allocation2 + $0x140] sm:$0xff]
      %v118 = vld [vmem:[#allocation2 + $0x148] sm:$0xff]
      %v119 = vld [vmem:[#allocation2 + $0x150] sm:$0xff]
      %v120 = vld [vmem:[#allocation2 + $0x158] sm:$0xff]
      %v121 = vld [vmem:[#allocation2 + $0x160] sm:$0xff]
      %v122 = vld [vmem:[#allocation2 + $0x168] sm:$0xff]
      %v123 = vld [vmem:[#allocation2 + $0x170] sm:$0xff]
      %v124 = vld [vmem:[#allocation2 + $0x178] sm:$0xff]
      %v125 = vld [vmem:[#allocation2 + $0x180] sm:$0xff]
      %v126 = vld [vmem:[#allocation2 + $0x188] sm:$0xff]
      %v127 = vld [vmem:[#allocation2 + $0x190] sm:$0xff]
      %v128 = vld [vmem:[#allocation2 + $0x198] sm:$0xff]
      %v129 = vld [vmem:[#allocation2 + $0x1a0] sm:$0xff]
      %v130 = vld [vmem:[#allocation2 + $0x1a8] sm:$0xff]
      %v131 = vld [vmem:[#allocation2 + $0x1b0] sm:$0xff]
      %v132 = vld [vmem:[#allocation2 + $0x1b8] sm:$0xff]
      %v133 = vld [vmem:[#allocation2 + $0x1c0] sm:$0xff]
      %v134 = vld [vmem:[#allocation2 + $0x1c8] sm:$0xff]
      %v135 = vld [vmem:[#allocation2 + $0x1d0] sm:$0xff]
      %v136 = vld [vmem:[#allocation2 + $0x1d8] sm:$0xff]
      %v137 = vld [vmem:[#allocation2 + $0x1e0] sm:$0xff]
      %v138 = vld [vmem:[#allocation2 + $0x1e8] sm:$0xff]
      %v139 = vld [vmem:[#allocation2 + $0x1f0] sm:$0xff]
      %v140 = vld [vmem:[#allocation2 + $0x1f8] sm:$0xff]
      %141 = vmatprep.subr.mxu0 %v78
      %142 = vmatpush1.msra.mxu0 %v77
      %143 = vmatprep.subr.mxu0 %v80
      %144 = vmatpush1.msra.mxu0 %v79
      %145 = vmatprep.subr.mxu0 %v82
      %146 = vmatpush1.msra.mxu0 %v81
      %147 = vmatprep.subr.mxu0 %v84
      %148 = vmatpush1.msra.mxu0 %v83
      %149 = vmatprep.subr.mxu0 %v86
      %150 = vmatpush1.msra.mxu0 %v85
      %151 = vmatprep.subr.mxu0 %v88
      %152 = vmatpush1.msra.mxu0 %v87
      %153 = vmatprep.subr.mxu0 %v90
      %154 = vmatpush1.msra.mxu0 %v89
      %155 = vmatprep.subr.mxu0 %v92
      %156 = vmatpush1.msra.mxu0 %v91
      %157 = vmatprep.subr.mxu0 %v94
      %158 = vmatpush1.msra.mxu0 %v93
      %159 = vmatprep.subr.mxu0 %v96
      %160 = vmatpush1.msra.mxu0 %v95
      %161 = vmatprep.subr.mxu0 %v98
      %162 = vmatpush1.msra.mxu0 %v97
      %163 = vmatprep.subr.mxu0 %v100
      %164 = vmatpush1.msra.mxu0 %v99
      %165 = vmatprep.subr.mxu0 %v102
      %166 = vmatpush1.msra.mxu0 %v101
      %167 = vmatprep.subr.mxu0 %v104
      %168 = vmatpush1.msra.mxu0 %v103
      %169 = vmatprep.subr.mxu0 %v106
      %170 = vmatpush1.msra.mxu0 %v105
      %171 = vmatprep.subr.mxu0 %v108
      %172 = vmatpush1.msra.mxu0 %v107
      %173 = vmatprep.subr.mxu0 %v110
      %174 = vmatpush1.msra.mxu0 %v109
      %175 = vmatprep.subr.mxu0 %v112
      %176 = vmatpush1.msra.mxu0 %v111
      %177 = vmatprep.subr.mxu0 %v114
      %178 = vmatpush1.msra.mxu0 %v113
      %179 = vmatprep.subr.mxu0 %v116
      %180 = vmatpush1.msra.mxu0 %v115
      %181 = vmatprep.subr.mxu0 %v118
      %182 = vmatpush1.msra.mxu0 %v117
      %183 = vmatprep.subr.mxu0 %v120
      %184 = vmatpush1.msra.mxu0 %v119
      %185 = vmatprep.subr.mxu0 %v122
      %186 = vmatpush1.msra.mxu0 %v121
      %187 = vmatprep.subr.mxu0 %v124
      %188 = vmatpush1.msra.mxu0 %v123
      %189 = vmatprep.subr.mxu0 %v126
      %190 = vmatpush1.msra.mxu0 %v125
      %191 = vmatprep.subr.mxu0 %v128
      %192 = vmatpush1.msra.mxu0 %v127
      %193 = vmatprep.subr.mxu0 %v130
      %194 = vmatpush1.msra.mxu0 %v129
      %195 = vmatprep.subr.mxu0 %v132
      %196 = vmatpush1.msra.mxu0 %v131
      %197 = vmatprep.subr.mxu0 %v134
      %198 = vmatpush1.msra.mxu0 %v133
      %199 = vmatprep.subr.mxu0 %v136
      %200 = vmatpush1.msra.mxu0 %v135
      %201 = vmatprep.subr.mxu0 %v138
      %202 = vmatpush1.msra.mxu0 %v137
      %203 = vmatprep.subr.mxu0 %v140
      %204 = vmatpush1.msra.mxu0 %v139
      %205 = vmatprep.mubr.f32.mxu0 %v70
      %206 = vmatmul.mubr.f32.gmra.mrb[0].mxu0 %v69
      %v207 = vpop.f32.mrb[0].mxu0
      %v208 = vadd.f32 %v47, %v207
      %v209 = vpop.f32.mrb[0].mxu0
      %v210 = vadd.f32 %v48, %v209
      %211 = vmatprep.mubr.f32.mxu0 %v72
      %212 = vmatmul.mubr.f32.gmra.mrb[0].mxu0 %v71
      %v213 = vpop.f32.mrb[0].mxu0
      %v214 = vadd.f32 %v49, %v213
      %v215 = vpop.f32.mrb[0].mxu0
      %v216 = vadd.f32 %v50, %v215
      %217 = vmatprep.mubr.f32.mxu0 %v74
      %218 = vmatmul.mubr.f32.gmra.mrb[0].mxu0 %v73
      %v219 = vpop.f32.mrb[0].mxu0
      %v220 = vadd.f32 %v51, %v219
      %v221 = vpop.f32.mrb[0].mxu0
      %v222 = vadd.f32 %v52, %v221
      %223 = vmatprep.mubr.f32.mxu0 %v76
      %224 = vmatmul.mubr.f32.gmra.mrb[0].mxu0 %v75
      %v225 = vpop.f32.mrb[0].mxu0
      %v226 = vadd.f32 %v53, %v225
      %v227 = vpop.f32.mrb[0].mxu0
      %v228 = vadd.f32 %v54, %v227
      %229 = vdwg.mxu0
      %230 = vst [vmem:[%s2] sm:$0xff] %v208
      %231 = vst [vmem:[%s2 + $0x8] sm:$0xff] %v210
      %232 = vst [vmem:[%s2 + $0x10] sm:$0xff] %v214
      %233 = vst [vmem:[%s2 + $0x18] sm:$0xff] %v216
      %234 = vst [vmem:[%s2 + $0x20] sm:$0xff] %v220
      %235 = vst [vmem:[%s2 + $0x28] sm:$0xff] %v222
      %236 = vst [vmem:[%s2 + $0x30] sm:$0xff] %v226
      %237 = vst [vmem:[%s2 + $0x38] sm:$0xff] %v228
    $region22: #{_lambda_.1} parent=1 // loop_footer
      %s68 = sadd.s32 1, %s64
    $region23: #{_lambda_.1} parent=1 // loop_footer_branch
      %63 = sbr.rel target = $region19
    $region24: #{_lambda_.1} parent=1 // loop_exit
      _
    // Predicated region
    $region25: #{_lambda_.1} parent=1 // pred_check
      _
    $region26: #{_lambda_.1} parent=1 // pred_check_branch
      %239 = sbr.rel (0) target = $region28
    $region27: #{_lambda_.1} parent=1 // pred_region
      _
    $region28: #{_lambda_.1} parent=1 // pred_fallthru
      _
    // Predicated region
    $region29: #{_lambda_.1} parent=1 // pred_check
      _
    $region30: #{_lambda_.1} parent=1 // pred_check_branch
      %241 = sbr.rel (0) target = $region32
    $region31: #{_lambda_.1} parent=1 // pred_region
      _
    $region32: #{_lambda_.1} parent=1 // pred_fallthru
      _
    %242 = vsyncpa [#allocation3], 1
    %243 = vsyncpa [#allocation5], 1

</llo_original>
